<compile_context>
chip_gen: v7x
topology: tpu7x:2x2x1
jax: 0.10.0
libtpu: 0.0.40
codegen_flags: <defaults>
</compile_context>

<pallas_src>
import functools
import math

import jax
import jax.numpy as jnp
from jax.experimental import pallas as pl
from jax.experimental.pallas import tpu as pltpu


def attention_head_kernel(x_ref, wqkv_ref, o_ref, *, head_size, precise):
    # Batch dim is squeezed out by the BlockSpec: refs are 2-D.
    x = x_ref[...]                           # (T, D)     f32
    w = wqkv_ref[...]                        # (D, 3*hs)  bf16 (fast) / f32 (precise)

    x_mm = x if precise else x.astype(jnp.bfloat16)

    # Fused Q|K|V projection: one matmul with 3x the N dimension.
    qkv = jnp.dot(x_mm, w, preferred_element_type=jnp.float32)   # (T, 3*hs) f32
    q = qkv[:, :head_size]                   # scale already folded into these columns
    k = qkv[:, head_size:2 * head_size]
    v = qkv[:, 2 * head_size:]

    q_mm = q if precise else q.astype(jnp.bfloat16)
    k_mm = k if precise else k.astype(jnp.bfloat16)

    # scores = q @ k^T (contract over head dim; no explicit transpose needed).
    scores = jnp.einsum("qh,kh->qk", q_mm, k_mm,
                        preferred_element_type=jnp.float32)      # (T, T) f32

    # Numerically-stable softmax over keys (f32 elementwise math).
    m = jnp.max(scores, axis=-1, keepdims=True)
    p = jnp.exp(scores - m)
    s = jnp.sum(p, axis=-1, keepdims=True)
    if precise:
        p = p / s
    else:
        p = p * pl.reciprocal(s, approx=True)                    # EUP, not VALU

    p_mm = p if precise else p.astype(jnp.bfloat16)
    v_mm = v if precise else v.astype(jnp.bfloat16)

    out = jnp.dot(p_mm, v_mm, preferred_element_type=jnp.float32)  # (T, hs) f32
    o_ref[...] = out.astype(o_ref.dtype)


def attention_head(x, wq, wk, wv, *, precise=False):
    """x: (B, T, D); wq/wk/wv: PyTorch Linear weights of shape (head_size, D)."""
    B, T, D = x.shape
    hs = wq.shape[0]
    scale = 1.0 / math.sqrt(hs)

    # Trace-time weight prep (outside the kernel): fuse Q|K|V into one (D, 3*hs)
    # weight, fold the attention scale into the Q columns, and cast to the
    # matmul dtype (halves the weight DMA in the bf16 path).
    w_qkv = jnp.concatenate([wq.T * scale, wk.T, wv.T], axis=1)   # (D, 3*hs)
    w_qkv = w_qkv.astype(jnp.float32 if precise else jnp.bfloat16)

    kernel = functools.partial(attention_head_kernel, head_size=hs, precise=precise)

    return pl.pallas_call(
        kernel,
        out_shape=jax.ShapeDtypeStruct((B, T, hs), x.dtype),
        grid=(B,),
        in_specs=[
            # None squeezes the batch dim -> kernel sees a 2-D (T, D) tile.
            pl.BlockSpec((None, T, D), lambda b: (b, 0, 0)),
            # Weight block index is constant across the grid (resident tile).
            pl.BlockSpec((D, 3 * hs), lambda b: (0, 0)),
        ],
        out_specs=pl.BlockSpec((None, T, hs), lambda b: (b, 0, 0)),
        compiler_params=pltpu.CompilerParams(
            dimension_semantics=("parallel",),
        ),
    )(x, w_qkv)


def reference_forward(x, wq, wk, wv):
    """Pure-JAX reference mirroring the PyTorch AttentionHead forward."""
    hs = wq.shape[0]
    hp = jax.lax.Precision.HIGHEST
    q = jnp.einsum("btd,hd->bth", x, wq, precision=hp)
    k = jnp.einsum("btd,hd->bth", x, wk, precision=hp)
    v = jnp.einsum("btd,hd->bth", x, wv, precision=hp)
    sc = jnp.einsum("bqh,bkh->bqk", q, k, precision=hp) / math.sqrt(hs)
    p = jax.nn.softmax(sc, axis=-1)
    return jnp.einsum("bqk,bkh->bqh", p, v, precision=hp)


if __name__ == "__main__":
    B, T, D, HS = 2, 8, 32, 8   # batch, seq, emb_dim, head_size

    key = jax.random.PRNGKey(0)
    kx, kq, kk, kv = jax.random.split(key, 4)
    x = jax.random.normal(kx, (B, T, D), jnp.float32)
    # nn.Linear(emb_dim, head_size, bias=False) weights: shape (head_size, emb_dim).
    wq = jax.random.normal(kq, (HS, D), jnp.float32) * 0.1
    wk = jax.random.normal(kk, (HS, D), jnp.float32) * 0.1
    wv = jax.random.normal(kv, (HS, D), jnp.float32) * 0.1

    ref = reference_forward(x, wq, wk, wv)

    # f32-matmul path: checks forward-pass parity with the module semantics.
    out_precise = jax.block_until_ready(
        attention_head(x, wq, wk, wv, precise=True))
    assert out_precise.shape == (B, T, HS)
    assert jnp.allclose(out_precise, ref, atol=1e-4, rtol=1e-4), (
        float(jnp.max(jnp.abs(out_precise - ref))))

    # Optimized path: bf16 MXU operands (f32 accumulation) + approx reciprocal.
    out_fast = jax.block_until_ready(
        attention_head(x, wq, wk, wv, precise=False))
    assert out_fast.shape == (B, T, HS)
    assert jnp.allclose(out_fast, ref, atol=2e-2, rtol=2e-2), (
        float(jnp.max(jnp.abs(out_fast - ref))))

    print("KERNEL_OK")
</pallas_src>

<mosaic_0001>
module attributes {stable_mosaic.version = 11 : i64} {
  func.func @attention_head_kernel(%arg0: i32, %arg1: memref<1x8x32xf32, #tpu.memory_space<vmem>>, %arg2: memref<32x24xf32, #tpu.memory_space<vmem>>, %arg3: memref<1x8x8xf32, #tpu.memory_space<vmem>>) attributes {dimension_semantics = [#tpu.dimension_semantics<parallel>], iteration_bounds = array<i64: 2>, scalar_prefetch = 0 : i64, scratch_operands = 0 : i64, tpu.core_type = #tpu.core_type<tc>, window_params = [{transform_indices = @transform_0, window_bounds = array<i64: 1, 8, 32>}, {pipeline_mode = #tpu.pipeline_mode<synchronous>, transform_indices = @transform_1, window_bounds = array<i64: 32, 24>}, {transform_indices = @transform_2, window_bounds = array<i64: 1, 8, 8>}]} {
    %c0 = arith.constant 0 : index
    %c0_0 = arith.constant 0 : index
    %c0_1 = arith.constant 0 : index
    %0 = vector.load %arg1[%c0, %c0_0, %c0_1] : memref<1x8x32xf32, #tpu.memory_space<vmem>>, vector<1x8x32xf32>
    %1 = vector.shape_cast %0 : vector<1x8x32xf32> to vector<8x32xf32>
    %c0_2 = arith.constant 0 : index
    %c0_3 = arith.constant 0 : index
    %2 = vector.load %arg2[%c0_2, %c0_3] : memref<32x24xf32, #tpu.memory_space<vmem>>, vector<32x24xf32>
    %cst = arith.constant dense<0.000000e+00> : vector<8x24xf32>
    %3 = tpu.matmul %1, %2, %cst {dimension_numbers = #tpu.dot_dimension_numbers<[1], [0], [0], [1], [0, 0, 1, 1], [], []>} : vector<8x32xf32>, vector<32x24xf32>, vector<8x24xf32> -> vector<8x24xf32>
    %4 = vector.extract_strided_slice %3 {offsets = [0, 0], sizes = [8, 8], strides = [1, 1]} : vector<8x24xf32> to vector<8x8xf32>
    %5 = vector.extract_strided_slice %3 {offsets = [0, 8], sizes = [8, 8], strides = [1, 1]} : vector<8x24xf32> to vector<8x8xf32>
    %6 = vector.extract_strided_slice %3 {offsets = [0, 16], sizes = [8, 8], strides = [1, 1]} : vector<8x24xf32> to vector<8x8xf32>
    "tpu.trace_start"() <{level = 10 : i32, message = "qh,kh->qk"}> : () -> ()
    %cst_4 = arith.constant dense<0.000000e+00> : vector<8x8xf32>
    %7 = tpu.matmul %4, %5, %cst_4 {dimension_numbers = #tpu.dot_dimension_numbers<[1], [1], [0], [0], [0, 0, 1, 0], [], []>} : vector<8x8xf32>, vector<8x8xf32>, vector<8x8xf32> -> vector<8x8xf32>
    "tpu.trace_stop"() : () -> ()
    %cst_5 = arith.constant dense<0xFF800000> : vector<8xf32>
    %8 = vector.multi_reduction <maximumf>, %7, %cst_5 [1] : vector<8x8xf32> to vector<8xf32>
    %9 = vector.shape_cast %8 : vector<8xf32> to vector<8x1xf32>
    %10 = vector.broadcast %9 : vector<8x1xf32> to vector<8x8xf32>
    %11 = arith.subf %7, %10 : vector<8x8xf32>
    %12 = math.exp %11 : vector<8x8xf32>
    %cst_6 = arith.constant dense<0.000000e+00> : vector<8xf32>
    %13 = vector.multi_reduction <add>, %12, %cst_6 [1] : vector<8x8xf32> to vector<8xf32>
    %14 = vector.shape_cast %13 : vector<8xf32> to vector<8x1xf32>
    %15 = vector.broadcast %14 : vector<8x1xf32> to vector<8x8xf32>
    %16 = arith.divf %12, %15 : vector<8x8xf32>
    %cst_7 = arith.constant dense<0.000000e+00> : vector<8x8xf32>
    %17 = tpu.matmul %16, %6, %cst_7 {dimension_numbers = #tpu.dot_dimension_numbers<[1], [0], [0], [1], [0, 0, 1, 1], [], []>} : vector<8x8xf32>, vector<8x8xf32>, vector<8x8xf32> -> vector<8x8xf32>
    %c0_8 = arith.constant 0 : index
    %c0_9 = arith.constant 0 : index
    %c0_10 = arith.constant 0 : index
    %18 = vector.load %arg3[%c0_8, %c0_9, %c0_10] : memref<1x8x8xf32, #tpu.memory_space<vmem>>, vector<1x8x8xf32>
    %19 = vector.shape_cast %18 : vector<1x8x8xf32> to vector<8x8xf32>
    %20 = vector.shape_cast %17 : vector<8x8xf32> to vector<1x8x8xf32>
    tpu.vector_store %arg3[%c0_8, %c0_9, %c0_10], %20 {strides = array<i32>} : memref<1x8x8xf32, #tpu.memory_space<vmem>>, vector<1x8x8xf32>,
    return
  }
  func.func @transform_0(%arg0: i32) -> (i32, i32, i32) {
    %c0_i32 = arith.constant 0 : i32
    %c0_i32_0 = arith.constant 0 : i32
    %c0_i32_1 = arith.constant 0 : i32
    return %arg0, %c0_i32, %c0_i32_0 : i32, i32, i32
  }
  func.func @transform_1(%arg0: i32) -> (i32, i32) {
    %c0_i32 = arith.constant 0 : i32
    %c0_i32_0 = arith.constant 0 : i32
    %c0_i32_1 = arith.constant 0 : i32
    return %c0_i32, %c0_i32_0 : i32, i32
  }
  func.func @transform_2(%arg0: i32) -> (i32, i32, i32) {
    %c0_i32 = arith.constant 0 : i32
    %c0_i32_0 = arith.constant 0 : i32
    %c0_i32_1 = arith.constant 0 : i32
    return %arg0, %c0_i32, %c0_i32_0 : i32, i32, i32
  }
}

</mosaic_0001>

<llo_original>
// kernel: tpu_custom_call.1
$region0: #{tpu_custom_call.1}
  #allocation0 [shape = 'u32[]', space=smem, size = 0x4, offset = 0x4, fixed_abs, tag = 'smem constant byte address 0x4 - core index']
  #allocation1 [shape = 'u32[144,128]{1,0:T(1,128)}', space=vmem, size = 0x12000, scoped, tag = 'internal scratch']
  %s0 = inlined_call_operand.vmem [shape: f32[2,8,32], index: 0, kind: input, shape index: {}]
  %s1 = inlined_call_operand.vmem [shape: f32[32,24], index: 1, kind: input, shape index: {}]
  %s2 = inlined_call_operand.hbm [shape: f32[2,8,8], index: 2, kind: output, shape index: {}]
  %s3 = sld [smem:[#allocation0]]
  $region41: #{tpu_custom_call.1} parent=0
    _
  %s5 = ssub.s32 1, %s3
  %s6 = scalar_select 0, %s5, %s3
  $region1: #{tpu_custom_call.1} parent=0
    #allocation2 [shape = 'u8[8192]{0}', space=vmem, size = 0x2000, scoped, tag = 'output window, operand 0']
    #allocation3 [shape = 's32[2]{0}', space=sflag, size = 0x8, scoped, tag = 'scoped memory for tpu_custom_call.1']
    %7 = vsyncpa [#allocation3], 0
    %s8 = scalar_lea.sflag [#allocation3], 1
    %9 = vsyncpa %s8, 0
    loop: start=0, step=1, limit=4
    $region2: #{tpu_custom_call.1} parent=1 // loop_pre_header
      _
    $region3: #{tpu_custom_call.1} parent=1 // loop_header
      %s11 = sphi 0, %s15
      %p12 = scmp.ge.s32.totalorder %s11, 4
      %s21 = sphi 0, %s23
      %s24 = sphi 0, %s21
      %s25 = sphi 0, %s24
      %s41 = sphi 0, %s25
      %s45 = sphi 0, %s45
      %s47 = sphi 0, %s45
      %s48 = sphi 0, %s47
      %s62 = sphi 0, %s48
      %s68 = sphi 0, %s70
      %s71 = sphi 0, %s68
      %s72 = sphi 0, %s71
      %s88 = sphi 0, %s72
    $region4: #{tpu_custom_call.1} parent=1 // loop_header_branch
      %14 = sbr.rel (%p12) target = $region8
    $region5: #{tpu_custom_call.1} parent=1 // loop_body
      %s16 = ssub.s32 %s11, 1
      %s17 = ssub.s32 %s11, 2
      %s18 = sadd.s32 %s11, 1
      %s19 = ssub.s32 %s11, %s18
      %p20 = scmp.eq.s32.totalorder %s19, 0
      %s22 = sadd.s32 %s21, 1
      %s23 = scalar_select %p20, %s21, %s22
      %p26 = pneg %p20
      %p27 = scmp.eq.s32.totalorder %s11, 1
      %p28 = por %p26, %p27
      %p29 = scmp.ne.s32.totalorder %s21, %s24
      %p30 = scmp.eq.s32.totalorder %s11, 0
      %p31 = por %p29, %p30
      %p32 = scmp.ne.s32.totalorder %s21, %s24
      %p33 = scmp.eq.s32.totalorder %s16, 1
      %p34 = por %p32, %p33
      %p35 = scmp.ne.s32.totalorder %s24, %s25
      %p36 = scmp.eq.s32.totalorder %s16, 0
      %p37 = por %p35, %p36
      %p38 = scmp.ne.s32.totalorder %s24, %s25
      %p39 = scmp.eq.s32.totalorder %s17, 1
      %p40 = por %p38, %p39
      %p42 = scmp.ne.s32.totalorder %s25, %s41
      %p43 = scmp.eq.s32.totalorder %s17, 0
      %p44 = por %p42, %p43
      %s46 = sadd.s32 %s45, 1
      %p49 = scmp.eq.s32.totalorder %s11, 1
      %p50 = scmp.ne.s32.totalorder %s45, %s47
      %p51 = scmp.eq.s32.totalorder %s11, 0
      %p52 = por %p50, %p51
      %p53 = scmp.ne.s32.totalorder %s45, %s47
      %p54 = scmp.eq.s32.totalorder %s16, 1
      %p55 = por %p53, %p54
      %p56 = scmp.ne.s32.totalorder %s47, %s48
      %p57 = scmp.eq.s32.totalorder %s16, 0
      %p58 = por %p56, %p57
      %p59 = scmp.ne.s32.totalorder %s47, %s48
      %p60 = scmp.eq.s32.totalorder %s17, 1
      %p61 = por %p59, %p60
      %p63 = scmp.ne.s32.totalorder %s48, %s62
      %p64 = scmp.eq.s32.totalorder %s17, 0
      %p65 = por %p63, %p64
      %s66 = ssub.s32 %s11, %s18
      %p67 = scmp.eq.s32.totalorder %s66, 0
      %s69 = sadd.s32 %s68, 1
      %s70 = scalar_select %p67, %s68, %s69
      %p73 = pneg %p67
      %p74 = scmp.eq.s32.totalorder %s11, 1
      %p75 = por %p73, %p74
      %p76 = scmp.ne.s32.totalorder %s68, %s71
      %p77 = scmp.eq.s32.totalorder %s11, 0
      %p78 = por %p76, %p77
      %p79 = scmp.ne.s32.totalorder %s68, %s71
      %p80 = scmp.eq.s32.totalorder %s16, 1
      %p81 = por %p79, %p80
      %p82 = scmp.ne.s32.totalorder %s71, %s72
      %p83 = scmp.eq.s32.totalorder %s16, 0
      %p84 = por %p82, %p83
      %p85 = scmp.ne.s32.totalorder %s71, %s72
      %p86 = scmp.eq.s32.totalorder %s17, 1
      %p87 = por %p85, %p86
      %p89 = scmp.ne.s32.totalorder %s72, %s88
      %p90 = scmp.eq.s32.totalorder %s17, 0
      %p91 = por %p89, %p90
      %p92 = scmp.le.s32.totalorder 1, %s11
      %p93 = scmp.lt.s32.totalorder %s11, 3
      %p94 = pnand %p92, %p93
      %p95 = pneg %p94
      // Predicated region
      $region9: #{tpu_custom_call.1} parent=5 // pred_check
        _
      $region10: #{tpu_custom_call.1} parent=5 // pred_check_branch
        %97 = sbr.rel (%p94) target = $region12
      $region11: #{tpu_custom_call.1} parent=5 // pred_region
        %s98 = ssub.s32 %s11, 1
        // Predicated region
        $region13: #{tpu_custom_call.1} parent=11 // pred_check
          %p99 = pneg %p58
        $region14: #{tpu_custom_call.1} parent=11 // pred_check_branch
          %101 = sbr.rel (%p99) target = $region16
        $region15: #{tpu_custom_call.1} parent=11 // pred_region
          _
        $region16: #{tpu_custom_call.1} parent=11 // pred_fallthru
          _
      $region12: #{tpu_custom_call.1} parent=5 // pred_fallthru
        _
      %p102 = scmp.lt.s32.totalorder %s11, 2
      // Predicated region
      $region17: #{tpu_custom_call.1} parent=5 // pred_check
        %p103 = pneg %p102
      $region18: #{tpu_custom_call.1} parent=5 // pred_check_branch
        %105 = sbr.rel (%p103) target = $region20
      $region19: #{tpu_custom_call.1} parent=5 // pred_region
        // Predicated region
        $region21: #{tpu_custom_call.1} parent=19 // pred_check
          %p106 = pneg %p31
        $region22: #{tpu_custom_call.1} parent=19 // pred_check_branch
          %108 = sbr.rel (%p106) target = $region24
        $region23: #{tpu_custom_call.1} parent=19 // pred_region
          %p109 = scmp.lt.s32.totalorder %s11, 1
          %s110 = scalar_select %p109, %s11, 1
          %s111 = smul.addr %s110, 8
          %s112 = scalar_lea.vmem %s0, %s111
        $region24: #{tpu_custom_call.1} parent=19 // pred_fallthru
          _
      $region20: #{tpu_custom_call.1} parent=5 // pred_fallthru
        _
      %p113 = scmp.le.s32.totalorder 1, %s11
      %p114 = scmp.lt.s32.totalorder %s11, 3
      %p115 = pnand %p113, %p114
      %p116 = pneg %p115
      // Predicated region
      $region25: #{tpu_custom_call.1} parent=5 // pred_check
        _
      $region26: #{tpu_custom_call.1} parent=5 // pred_check_branch
        %118 = sbr.rel (%p115) target = $region28
      $region27: #{tpu_custom_call.1} parent=5 // pred_region
        %s119 = ssub.s32 %s11, 1
        %p120 = scmp.lt.s32.totalorder %s16, 1
        %s121 = scalar_select %p120, %s16, 1
        %s122 = smul.addr %s121, 8
        %s123 = scalar_lea.vmem %s0, %s122
        %p124 = pneg %p37
        %p125 = pneg %p34
        %p126 = pneg %p58
        %p127 = pneg %p55
        %p128 = pneg %p84
        %p129 = pneg %p81
        %s130 = sand.u32 %s71, 1
        %s131 = scalar_lea.sflag [#allocation3], %s130
        %s132 = sand.u32 %s71, 1
        %s133 = smul.addr %s132, 8
        %s134 = scalar_lea.vmem [#allocation2], %s133
        %p135 = scmp.lt.s32.totalorder %s16, 1
        %s136 = scalar_select %p135, %s16, 1
        %s137 = smul.addr %s136, 8
        %s138 = scalar_lea.vmem %s0, %s137
        %v139 = vld [vmem:[%s138] sm:$0xff]
        %v140 = vld [vmem:[%s1] sm:$0xff]
        %v141 = vld [vmem:[%s1 + $0x8] sm:$0xff]
        %v142 = vld [vmem:[%s1 + $0x10] sm:$0xff]
        %v143 = vld [vmem:[%s1 + $0x18] sm:$0xff]
        %vm144 = vcmask 261120
        %v146 = vsel %vm144, %v139, 0
        %148 = vmatprep.subr.mxu0 0.0
        %149 = vmatpush1.msra.mxu0 %v140
        %150 = vmatprep.subr.mxu0 0.0
        %151 = vmatpush1.msra.mxu0 %v141
        %152 = vmatprep.subr.mxu0 0.0
        %153 = vmatpush1.msra.mxu0 %v142
        %154 = vmatprep.subr.mxu0 0.0
        %155 = vmatpush1.msra.mxu0 %v143
        %156 = vmatprep.subr.mxu0 0.0
        %157 = vmatpush1.msra.mxu0 0.0
        %158 = vmatprep.subr.mxu0 0.0
        %159 = vmatpush1.msra.mxu0 0.0
        %160 = vmatprep.subr.mxu0 0.0
        %161 = vmatpush1.msra.mxu0 0.0
        %162 = vmatprep.subr.mxu0 0.0
        %163 = vmatpush1.msra.mxu0 0.0
        %164 = vmatprep.subr.mxu0 0.0
        %165 = vmatpush1.msra.mxu0 0.0
        %166 = vmatprep.subr.mxu0 0.0
        %167 = vmatpush1.msra.mxu0 0.0
        %168 = vmatprep.subr.mxu0 0.0
        %169 = vmatpush1.msra.mxu0 0.0
        %170 = vmatprep.subr.mxu0 0.0
        %171 = vmatpush1.msra.mxu0 0.0
        %172 = vmatprep.subr.mxu0 0.0
        %173 = vmatpush1.msra.mxu0 0.0
        %174 = vmatprep.subr.mxu0 0.0
        %175 = vmatpush1.msra.mxu0 0.0
        %176 = vmatprep.subr.mxu0 0.0
        %177 = vmatpush1.msra.mxu0 0.0
        %178 = vmatprep.subr.mxu0 0.0
        %179 = vmatpush1.msra.mxu0 0.0
        %180 = vmatprep.subr.mxu0 0.0
        %181 = vmatpush1.msra.mxu0 0.0
        %182 = vmatprep.subr.mxu0 0.0
        %183 = vmatpush1.msra.mxu0 0.0
        %184 = vmatprep.subr.mxu0 0.0
        %185 = vmatpush1.msra.mxu0 0.0
        %186 = vmatprep.subr.mxu0 0.0
        %187 = vmatpush1.msra.mxu0 0.0
        %188 = vmatprep.subr.mxu0 0.0
        %189 = vmatpush1.msra.mxu0 0.0
        %190 = vmatprep.subr.mxu0 0.0
        %191 = vmatpush1.msra.mxu0 0.0
        %192 = vmatprep.subr.mxu0 0.0
        %193 = vmatpush1.msra.mxu0 0.0
        %194 = vmatprep.subr.mxu0 0.0
        %195 = vmatpush1.msra.mxu0 0.0
        %196 = vmatprep.subr.mxu0 0.0
        %197 = vmatpush1.msra.mxu0 0.0
        %198 = vmatprep.subr.mxu0 0.0
        %199 = vmatpush1.msra.mxu0 0.0
        %200 = vmatprep.subr.mxu0 0.0
        %201 = vmatpush1.msra.mxu0 0.0
        %202 = vmatprep.subr.mxu0 0.0
        %203 = vmatpush1.msra.mxu0 0.0
        %204 = vmatprep.subr.mxu0 0.0
        %205 = vmatpush1.msra.mxu0 0.0
        %206 = vmatprep.subr.mxu0 0.0
        %207 = vmatpush1.msra.mxu0 0.0
        %208 = vmatprep.subr.mxu0 0.0
        %209 = vmatpush1.msra.mxu0 0.0
        %210 = vmatprep.subr.mxu0 0.0
        %211 = vmatpush1.msra.mxu0 0.0
        %212 = vmatprep.mubr.f32.mxu0 0.0
        %213 = vmatmul.mubr.f32.gmra.mrb[0].mxu0 %v146
        %v214 = vpop.f32.mrb[0].mxu0
        %v215 = vadd.f32 0.0, %v214
        %v216 = vpop.f32.mrb[0].mxu0
        %217 = vdwg.mxu0
        %219 = vrot.lane.b32.xlu0 %v215, 120
        %v220 = vpop.permute.xlu0 %219
        %vm221 = vcmask 64512
        %v222 = vsel %vm221, %v215, 0
        %v224 = vsel %vm221, %v220, 0
        %226 = vmatprep.subr.mxu0 0.0
        %227 = vmatpush1.xpose.msra.mxu0 %v224
        %228 = vmatprep.subr.mxu0 0.0
        %229 = vmatpush1.xpose.msra.mxu0 0.0
        %230 = vmatprep.subr.mxu0 0.0
        %231 = vmatpush1.xpose.msra.mxu0 0.0
        %232 = vmatprep.subr.mxu0 0.0
        %233 = vmatpush1.xpose.msra.mxu0 0.0
        %234 = vmatprep.subr.mxu0 0.0
        %235 = vmatpush1.xpose.msra.mxu0 0.0
        %236 = vmatprep.subr.mxu0 0.0
        %237 = vmatpush1.xpose.msra.mxu0 0.0
        %238 = vmatprep.subr.mxu0 0.0
        %239 = vmatpush1.xpose.msra.mxu0 0.0
        %240 = vmatprep.subr.mxu0 0.0
        %241 = vmatpush1.xpose.msra.mxu0 0.0
        %242 = vmatprep.subr.mxu0 0.0
        %243 = vmatpush1.xpose.msra.mxu0 0.0
        %244 = vmatprep.subr.mxu0 0.0
        %245 = vmatpush1.xpose.msra.mxu0 0.0
        %246 = vmatprep.subr.mxu0 0.0
        %247 = vmatpush1.xpose.msra.mxu0 0.0
        %248 = vmatprep.subr.mxu0 0.0
        %249 = vmatpush1.xpose.msra.mxu0 0.0
        %250 = vmatprep.subr.mxu0 0.0
        %251 = vmatpush1.xpose.msra.mxu0 0.0
        %252 = vmatprep.subr.mxu0 0.0
        %253 = vmatpush1.xpose.msra.mxu0 0.0
        %254 = vmatprep.subr.mxu0 0.0
        %255 = vmatpush1.xpose.msra.mxu0 0.0
        %256 = vmatprep.subr.mxu0 0.0
        %257 = vmatpush1.xpose.msra.mxu0 0.0
        %258 = vmatprep.subr.mxu0 0.0
        %259 = vmatpush1.xpose.msra.mxu0 0.0
        %260 = vmatprep.subr.mxu0 0.0
        %261 = vmatpush1.xpose.msra.mxu0 0.0
        %262 = vmatprep.subr.mxu0 0.0
        %263 = vmatpush1.xpose.msra.mxu0 0.0
        %264 = vmatprep.subr.mxu0 0.0
        %265 = vmatpush1.xpose.msra.mxu0 0.0
        %266 = vmatprep.subr.mxu0 0.0
        %267 = vmatpush1.xpose.msra.mxu0 0.0
        %268 = vmatprep.subr.mxu0 0.0
        %269 = vmatpush1.xpose.msra.mxu0 0.0
        %270 = vmatprep.subr.mxu0 0.0
        %271 = vmatpush1.xpose.msra.mxu0 0.0
        %272 = vmatprep.subr.mxu0 0.0
        %273 = vmatpush1.xpose.msra.mxu0 0.0
        %274 = vmatprep.subr.mxu0 0.0
        %275 = vmatpush1.xpose.msra.mxu0 0.0
        %276 = vmatprep.subr.mxu0 0.0
        %277 = vmatpush1.xpose.msra.mxu0 0.0
        %278 = vmatprep.subr.mxu0 0.0
        %279 = vmatpush1.xpose.msra.mxu0 0.0
        %280 = vmatprep.subr.mxu0 0.0
        %281 = vmatpush1.xpose.msra.mxu0 0.0
        %282 = vmatprep.subr.mxu0 0.0
        %283 = vmatpush1.xpose.msra.mxu0 0.0
        %284 = vmatprep.subr.mxu0 0.0
        %285 = vmatpush1.xpose.msra.mxu0 0.0
        %286 = vmatprep.subr.mxu0 0.0
        %287 = vmatpush1.xpose.msra.mxu0 0.0
        %288 = vmatprep.subr.mxu0 0.0
        %289 = vmatpush1.xpose.msra.mxu0 0.0
        %290 = vmatprep.mubr.f32.mxu0 0.0
        %291 = vmatmul.mubr.f32.gmra.mrb[0].mxu0 %v222
        %v292 = vpop.f32.mrb[0].mxu0
        %v293 = vadd.f32 0.0, %v292
        %v294 = vpop.f32.mrb[0].mxu0
        %295 = vdwg.mxu0
        %v296 = vsel %vm221, %v293, -inf
        %297 = vmax.xlane.f32.xlu0 %v296
        %v298 = vpop.xlane.xlu0 %297
        %v299 = vsub.f32 %v293, %v298
        %v300 = vmul.f32 %v299, 1.442695
        %v301 = vpow.pop %v300
        %v302 = vsel %vm221, %v301, 0.0
        %303 = vadd.xlane.f32.xlu0 %v302
        %v304 = vpop.xlane.xlu0 %303
        %v305 = vrcp.pop %v304
        %v306 = vmul.f32 %v301, %v305
        %307 = vrot.lane.b32.xlu0 %v215, 112
        %v308 = vpop.permute.xlu0 %307
        %v311 = vsel %vm221, %v306, 0
        %313 = vmatprep.subr.mxu0 0.0
        %314 = vmatpush1.msra.mxu0 %v308
        %315 = vmatprep.subr.mxu0 0.0
        %316 = vmatpush1.msra.mxu0 0.0
        %317 = vmatprep.subr.mxu0 0.0
        %318 = vmatpush1.msra.mxu0 0.0
        %319 = vmatprep.subr.mxu0 0.0
        %320 = vmatpush1.msra.mxu0 0.0
        %321 = vmatprep.subr.mxu0 0.0
        %322 = vmatpush1.msra.mxu0 0.0
        %323 = vmatprep.subr.mxu0 0.0
        %324 = vmatpush1.msra.mxu0 0.0
        %325 = vmatprep.subr.mxu0 0.0
        %326 = vmatpush1.msra.mxu0 0.0
        %327 = vmatprep.subr.mxu0 0.0
        %328 = vmatpush1.msra.mxu0 0.0
        %329 = vmatprep.subr.mxu0 0.0
        %330 = vmatpush1.msra.mxu0 0.0
        %331 = vmatprep.subr.mxu0 0.0
        %332 = vmatpush1.msra.mxu0 0.0
        %333 = vmatprep.subr.mxu0 0.0
        %334 = vmatpush1.msra.mxu0 0.0
        %335 = vmatprep.subr.mxu0 0.0
        %336 = vmatpush1.msra.mxu0 0.0
        %337 = vmatprep.subr.mxu0 0.0
        %338 = vmatpush1.msra.mxu0 0.0
        %339 = vmatprep.subr.mxu0 0.0
        %340 = vmatpush1.msra.mxu0 0.0
        %341 = vmatprep.subr.mxu0 0.0
        %342 = vmatpush1.msra.mxu0 0.0
        %343 = vmatprep.subr.mxu0 0.0
        %344 = vmatpush1.msra.mxu0 0.0
        %345 = vmatprep.subr.mxu0 0.0
        %346 = vmatpush1.msra.mxu0 0.0
        %347 = vmatprep.subr.mxu0 0.0
        %348 = vmatpush1.msra.mxu0 0.0
        %349 = vmatprep.subr.mxu0 0.0
        %350 = vmatpush1.msra.mxu0 0.0
        %351 = vmatprep.subr.mxu0 0.0
        %352 = vmatpush1.msra.mxu0 0.0
        %353 = vmatprep.subr.mxu0 0.0
        %354 = vmatpush1.msra.mxu0 0.0
        %355 = vmatprep.subr.mxu0 0.0
        %356 = vmatpush1.msra.mxu0 0.0
        %357 = vmatprep.subr.mxu0 0.0
        %358 = vmatpush1.msra.mxu0 0.0
        %359 = vmatprep.subr.mxu0 0.0
        %360 = vmatpush1.msra.mxu0 0.0
        %361 = vmatprep.subr.mxu0 0.0
        %362 = vmatpush1.msra.mxu0 0.0
        %363 = vmatprep.subr.mxu0 0.0
        %364 = vmatpush1.msra.mxu0 0.0
        %365 = vmatprep.subr.mxu0 0.0
        %366 = vmatpush1.msra.mxu0 0.0
        %367 = vmatprep.subr.mxu0 0.0
        %368 = vmatpush1.msra.mxu0 0.0
        %369 = vmatprep.subr.mxu0 0.0
        %370 = vmatpush1.msra.mxu0 0.0
        %371 = vmatprep.subr.mxu0 0.0
        %372 = vmatpush1.msra.mxu0 0.0
        %373 = vmatprep.subr.mxu0 0.0
        %374 = vmatpush1.msra.mxu0 0.0
        %375 = vmatprep.subr.mxu0 0.0
        %376 = vmatpush1.msra.mxu0 0.0
        %377 = vmatprep.mubr.f32.mxu0 0.0
        %378 = vmatmul.mubr.f32.gmra.mrb[0].mxu0 %v311
        %v379 = vpop.f32.mrb[0].mxu0
        %v380 = vadd.f32 0.0, %v379
        %v381 = vpop.f32.mrb[0].mxu0
        %382 = vdwg.mxu0
        %383 = vst.msk [vmem:[%s134] sm:$0xff] %vm221, %v380
        %s384 = sand.u32 %s71, 1
        %s385 = scalar_lea.sflag [#allocation3], %s384
        %s386 = sand.u32 %s71, 1
        %s387 = smul.addr %s386, 8
        %s388 = scalar_lea.vmem [#allocation2], %s387
        // Predicated region
        $region29: #{tpu_custom_call.1} parent=27 // pred_check
          %p389 = pneg %p81
        $region30: #{tpu_custom_call.1} parent=27 // pred_check_branch
          %391 = sbr.rel (%p389) target = $region32
        $region31: #{tpu_custom_call.1} parent=27 // pred_region
          %s393 = ssub.s32 128, 128
          %394 = vsyncadd %s385, %s393
          %s395 = smul.addr %s16, 128
          %s396 = scalar_lea.hbm %s2, %s395
          %s398 = sshll.u32 %s388, 4
          %s399 = int_to_ptr.vmem [resolvable:$true] %s398
          %401 = dma.vmem_to_hbm [thread:$0]  %s399, 128, %s396, %s385
        $region32: #{tpu_custom_call.1} parent=27 // pred_fallthru
          _
      $region28: #{tpu_custom_call.1} parent=5 // pred_fallthru
        _
      %p402 = scmp.le.s32.totalorder 2, %s11
      // Predicated region
      $region33: #{tpu_custom_call.1} parent=5 // pred_check
        %p403 = pneg %p402
      $region34: #{tpu_custom_call.1} parent=5 // pred_check_branch
        %405 = sbr.rel (%p403) target = $region36
      $region35: #{tpu_custom_call.1} parent=5 // pred_region
        %s406 = ssub.s32 %s11, 2
        // Predicated region
        $region37: #{tpu_custom_call.1} parent=35 // pred_check
          %p407 = pneg %p87
        $region38: #{tpu_custom_call.1} parent=35 // pred_check_branch
          %409 = sbr.rel (%p407) target = $region40
        $region39: #{tpu_custom_call.1} parent=35 // pred_region
          %s410 = sand.u32 %s72, 1
          %s411 = scalar_lea.sflag [#allocation3], %s410
          %s412 = sand.u32 %s72, 1
          %s413 = smul.addr %s412, 8
          %s414 = scalar_lea.vmem [#allocation2], %s413
          %415 = dma.done %s411, 128
        $region40: #{tpu_custom_call.1} parent=35 // pred_fallthru
          _
      $region36: #{tpu_custom_call.1} parent=5 // pred_fallthru
        _
    $region6: #{tpu_custom_call.1} parent=1 // loop_footer
      %s15 = sadd.s32 1, %s11
    $region7: #{tpu_custom_call.1} parent=1 // loop_footer_branch
      %10 = sbr.rel target = $region3
    $region8: #{tpu_custom_call.1} parent=1 // loop_exit
      _
    %416 = vsyncpa [#allocation3], 1
    %s417 = scalar_lea.sflag [#allocation3], 1
    %418 = vsyncpa %s417, 1

</llo_original>
